<compile_context>
chip_gen: v6e
topology: v6e:2x2x1
jax: 0.10.0
libtpu: 0.0.40
codegen_flags: <defaults>
</compile_context>

<pallas_src>
import functools

import jax
import jax.numpy as jnp
from jax.experimental import pallas as pl
from jax.experimental.pallas import tpu as pltpu


_VMEM_LIMIT_BYTES = 48 << 20   # < v7x's 64 MiB physical, >> v5e's 16 MiB scoped default
_VMEM_TILE_BUDGET = 40 << 20   # keep the per-tile estimate below the limit w/ headroom


def _mlp_kernel(z_ref, a_ref, w1z_ref, w1a_ref, b1_ref, w2_ref, b2_ref,
                w3_ref, b3_ref, o_ref):
    """Whole 3-layer MLP for one batch tile.

    z_ref:  (block_rows, z_dim)   a_ref: (block_rows, a_dim)
    w1z/w1a: first-layer weight split along the input axis (concat-free).
    b3_ref: (1,) scalar bias in SMEM.
    o_ref:  (1, 1, block_rows) probabilities, stored lane-major (lane-dense).
    """
    # Layer 1: cat([z, a]) @ W1 + b1  ==  z @ W1[:z_dim] + a @ W1[z_dim:] + b1
    h1 = (jnp.dot(z_ref[...], w1z_ref[...], preferred_element_type=jnp.float32)
          + jnp.dot(a_ref[...], w1a_ref[...], preferred_element_type=jnp.float32)
          + b1_ref[...].astype(jnp.float32))
    h1 = jnp.maximum(h1, 0.0)                                    # ReLU (f32 VPU)

    # Layer 2
    h2 = (jnp.dot(h1.astype(w2_ref.dtype), w2_ref[...],
                  preferred_element_type=jnp.float32)
          + b2_ref[...].astype(jnp.float32))
    h2 = jnp.maximum(h2, 0.0)                                    # ReLU

    # Layer 3 + Sigmoid
    logits = (jnp.dot(h2.astype(w3_ref.dtype), w3_ref[...],
                      preferred_element_type=jnp.float32)
              + b3_ref[0])                                       # (block_rows, 1)
    probs = jax.nn.sigmoid(logits)

    # Lane-dense store: (block_rows, 1) -> (1, 1, block_rows) so the writeback
    # is an unmasked full-lane vst instead of 1-useful-lane masked stores.
    o_ref[...] = probs.reshape(o_ref.shape).astype(o_ref.dtype)


def _pick_block_rows(B, block_rows, in_itemsize):
    """Largest 8-aligned batch tile <= block_rows that fits the VMEM budget."""
    if B < 8:
        return B                       # full-array block (equal-dims rule), grid=1
    b_aligned = ((B + 7) // 8) * 8
    br = max(8, (min(block_rows, b_aligned) // 8) * 8)

    def vmem_estimate(r):
        # z/a tiles are lane-padded to 128 lanes and double-buffered; add a
        # generous allowance for the f32 intermediates (h1/h2/logits/probs,
        # each held as an (r, 128)-padded f32 buffer) plus weights/output slack.
        io = 2 * 2 * r * 128 * in_itemsize
        tmp = 4 * r * 128 * 4
        return io + tmp + (2 << 20)

    while br > 8 and vmem_estimate(br) > _VMEM_TILE_BUDGET:
        br = max(8, ((br // 2) // 8) * 8)
    return br


@functools.partial(jax.jit, static_argnames=("block_rows",))
def effect_discrim_forward(z_emb, a_emb, params, block_rows=8192):
    """Pallas implementation of EffectDiscrim.forward.

    z_emb: (B, z_dim), a_emb: (B, a_dim)  ->  (B, 1) probabilities (float32).
    Pass bf16 z_emb/a_emb to halve HBM read traffic (f32 accumulation inside).
    """
    w1, b1, w2, b2, w3, b3 = params
    B, z_dim = z_emb.shape
    a_dim = a_emb.shape[1]
    H = w1.shape[1]

    # Stream activations in the caller's dtype -- no wrapper-side cast of z/a
    # (that would be an extra HBM round trip).  Only the tiny weights are cast.
    in_dtype = z_emb.dtype
    a_emb = a_emb.astype(in_dtype)          # no-op when dtypes already match

    br = _pick_block_rows(B, int(block_rows), in_dtype.itemsize)
    num_blocks = pl.cdiv(B, br)

    # Concat-free layer 1: split W1 along its input axis (trace-time, tiny).
    w1z = w1[:z_dim].astype(in_dtype)
    w1a = w1[z_dim:].astype(in_dtype)
    w2c = w2.astype(in_dtype)
    w3c = w3.astype(in_dtype)
    b1r = b1.reshape(1, H).astype(jnp.float32)
    b2r = b2.reshape(1, H).astype(jnp.float32)
    b3r = b3.reshape((1,)).astype(jnp.float32)     # scalar bias -> SMEM

    out = pl.pallas_call(
        _mlp_kernel,
        out_shape=jax.ShapeDtypeStruct((num_blocks, 1, br), jnp.float32),
        grid_spec=pltpu.PrefetchScalarGridSpec(
            num_scalar_prefetch=0,
            grid=(num_blocks,),
            in_specs=[
                pl.BlockSpec((br, z_dim), lambda i: (i, 0)),        # z tile
                pl.BlockSpec((br, a_dim), lambda i: (i, 0)),        # a tile
                pl.BlockSpec((z_dim, H), lambda i: (0, 0)),         # W1[:z_dim]
                pl.BlockSpec((a_dim, H), lambda i: (0, 0)),         # W1[z_dim:]
                pl.BlockSpec((1, H), lambda i: (0, 0)),             # b1
                pl.BlockSpec((H, H), lambda i: (0, 0)),             # W2
                pl.BlockSpec((1, H), lambda i: (0, 0)),             # b2
                pl.BlockSpec((H, 1), lambda i: (0, 0)),             # W3
                pl.BlockSpec(memory_space=pltpu.MemorySpace.SMEM),  # b3 (scalar)
            ],
            out_specs=pl.BlockSpec((1, 1, br), lambda i: (i, 0, 0)),
        ),
        compiler_params=pltpu.CompilerParams(
            dimension_semantics=("parallel",),
            vmem_limit_bytes=_VMEM_LIMIT_BYTES),
    )(z_emb, a_emb, w1z, w1a, b1r, w2c, b2r, w3c, b3r)

    # (num_blocks, 1, br) lane-major slab -> (B, 1) in batch order; the last
    # block's overhang rows (computed on undefined data) are sliced off here.
    return out.reshape(-1)[:B].reshape(B, 1)


def init_params(key, z_dim, a_dim, hidden_dim=32):
    """Deterministic init mirroring nn.Linear defaults (U[-1/sqrt(fan_in), +])."""
    in_dim = z_dim + a_dim
    ks = jax.random.split(key, 6)

    def linear(kw, kb, fan_in, fan_out):
        bound = 1.0 / jnp.sqrt(jnp.float32(fan_in))
        # stored as (in, out) so the kernel computes x @ W + b
        w = jax.random.uniform(kw, (fan_in, fan_out), jnp.float32, -bound, bound)
        b = jax.random.uniform(kb, (1, fan_out), jnp.float32, -bound, bound)
        return w, b

    w1, b1 = linear(ks[0], ks[1], in_dim, hidden_dim)
    w2, b2 = linear(ks[2], ks[3], hidden_dim, hidden_dim)
    w3, b3 = linear(ks[4], ks[5], hidden_dim, 1)
    return (w1, b1, w2, b2, w3, b3)


def _reference_forward(z_emb, a_emb, params):
    w1, b1, w2, b2, w3, b3 = params
    x = jnp.concatenate([z_emb, a_emb], axis=-1)
    h = jax.nn.relu(x @ w1 + b1)
    h = jax.nn.relu(h @ w2 + b2)
    return jax.nn.sigmoid(h @ w3 + b3)


if __name__ == "__main__":
    z_dim, a_dim, hidden_dim = 16, 16, 32

    key = jax.random.PRNGKey(0)
    k_params, k_z, k_a = jax.random.split(key, 3)
    params = init_params(k_params, z_dim, a_dim, hidden_dim)

    # Case 1: small batch, single grid step (default large tile auto-capped).
    B1 = 16
    z1 = jax.random.normal(k_z, (B1, z_dim), jnp.float32)
    a1 = jax.random.normal(k_a, (B1, a_dim), jnp.float32)
    out1 = jax.block_until_ready(effect_discrim_forward(z1, a1, params))
    ref1 = _reference_forward(z1, a1, params)
    assert out1.shape == (B1, 1)
    assert jnp.allclose(out1, ref1, atol=1e-5, rtol=1e-5)

    # Case 2: ragged batch, several grid steps; the last block overhangs the
    # array (no wrapper-side pad) and its garbage rows are sliced off.
    B2 = 300
    kz2, ka2 = jax.random.split(jax.random.PRNGKey(1))
    z2 = jax.random.normal(kz2, (B2, z_dim), jnp.float32)
    a2 = jax.random.normal(ka2, (B2, a_dim), jnp.float32)
    out2 = jax.block_until_ready(
        effect_discrim_forward(z2, a2, params, block_rows=128))
    ref2 = _reference_forward(z2, a2, params)
    assert out2.shape == (B2, 1)
    assert jnp.allclose(out2, ref2, atol=1e-5, rtol=1e-5)

    # Case 3: tiny batch (< 8 rows) -> single full-array block.
    B3 = 5
    kz3, ka3 = jax.random.split(jax.random.PRNGKey(2))
    z3 = jax.random.normal(kz3, (B3, z_dim), jnp.float32)
    a3 = jax.random.normal(ka3, (B3, a_dim), jnp.float32)
    out3 = jax.block_until_ready(effect_discrim_forward(z3, a3, params))
    ref3 = _reference_forward(z3, a3, params)
    assert out3.shape == (B3, 1)
    assert jnp.allclose(out3, ref3, atol=1e-5, rtol=1e-5)

    # Case 4: caller-provided bf16 activation streams (weights auto-matched);
    # dots still accumulate in f32, so only a loose tolerance is needed.
    out4 = jax.block_until_ready(
        effect_discrim_forward(z1.astype(jnp.bfloat16),
                               a1.astype(jnp.bfloat16), params))
    assert out4.shape == (B1, 1)
    assert float(jnp.max(jnp.abs(out4 - ref1))) < 5e-2

    print("KERNEL_OK")
</pallas_src>

<mosaic_0001>
module attributes {stable_mosaic.version = 11 : i64} {
  func.func @_mlp_kernel(%arg0: i32, %arg1: memref<16x16xf32, #tpu.memory_space<vmem>>, %arg2: memref<16x16xf32, #tpu.memory_space<vmem>>, %arg3: memref<16x32xf32, #tpu.memory_space<vmem>>, %arg4: memref<16x32xf32, #tpu.memory_space<vmem>>, %arg5: memref<1x32xf32, #tpu.memory_space<vmem>>, %arg6: memref<32x32xf32, #tpu.memory_space<vmem>>, %arg7: memref<1x32xf32, #tpu.memory_space<vmem>>, %arg8: memref<32x1xf32, #tpu.memory_space<vmem>>, %arg9: memref<1xf32, #tpu.memory_space<smem>>, %arg10: memref<1x1x16xf32, #tpu.memory_space<vmem>>) attributes {dimension_semantics = [#tpu.dimension_semantics<parallel>], iteration_bounds = array<i64: 1>, scalar_prefetch = 0 : i64, scratch_operands = 0 : i64, tpu.core_type = #tpu.core_type<tc>, window_params = [{transform_indices = @transform_0, window_bounds = array<i64: 16, 16>}, {transform_indices = @transform_1, window_bounds = array<i64: 16, 16>}, {pipeline_mode = #tpu.pipeline_mode<synchronous>, transform_indices = @transform_2, window_bounds = array<i64: 16, 32>}, {pipeline_mode = #tpu.pipeline_mode<synchronous>, transform_indices = @transform_3, window_bounds = array<i64: 16, 32>}, {pipeline_mode = #tpu.pipeline_mode<synchronous>, transform_indices = @transform_4, window_bounds = array<i64: 1, 32>}, {pipeline_mode = #tpu.pipeline_mode<synchronous>, transform_indices = @transform_5, window_bounds = array<i64: 32, 32>}, {pipeline_mode = #tpu.pipeline_mode<synchronous>, transform_indices = @transform_6, window_bounds = array<i64: 1, 32>}, {pipeline_mode = #tpu.pipeline_mode<synchronous>, transform_indices = @transform_7, window_bounds = array<i64: 32, 1>}, {transform_indices = @transform_8, window_bounds = array<i64: 1>}, {transform_indices = @transform_9, window_bounds = array<i64: 1, 1, 16>}]} {
    %c0 = arith.constant 0 : index
    %c0_0 = arith.constant 0 : index
    %0 = vector.load %arg1[%c0, %c0_0] : memref<16x16xf32, #tpu.memory_space<vmem>>, vector<16x16xf32>
    %c0_1 = arith.constant 0 : index
    %c0_2 = arith.constant 0 : index
    %1 = vector.load %arg3[%c0_1, %c0_2] : memref<16x32xf32, #tpu.memory_space<vmem>>, vector<16x32xf32>
    %cst = arith.constant dense<0.000000e+00> : vector<16x32xf32>
    %2 = tpu.matmul %0, %1, %cst {dimension_numbers = #tpu.dot_dimension_numbers<[1], [0], [0], [1], [0, 0, 1, 1], [], []>} : vector<16x16xf32>, vector<16x32xf32>, vector<16x32xf32> -> vector<16x32xf32>
    %c0_3 = arith.constant 0 : index
    %c0_4 = arith.constant 0 : index
    %3 = vector.load %arg2[%c0_3, %c0_4] : memref<16x16xf32, #tpu.memory_space<vmem>>, vector<16x16xf32>
    %c0_5 = arith.constant 0 : index
    %c0_6 = arith.constant 0 : index
    %4 = vector.load %arg4[%c0_5, %c0_6] : memref<16x32xf32, #tpu.memory_space<vmem>>, vector<16x32xf32>
    %cst_7 = arith.constant dense<0.000000e+00> : vector<16x32xf32>
    %5 = tpu.matmul %3, %4, %cst_7 {dimension_numbers = #tpu.dot_dimension_numbers<[1], [0], [0], [1], [0, 0, 1, 1], [], []>} : vector<16x16xf32>, vector<16x32xf32>, vector<16x32xf32> -> vector<16x32xf32>
    %6 = arith.addf %2, %5 : vector<16x32xf32>
    %c0_8 = arith.constant 0 : index
    %c0_9 = arith.constant 0 : index
    %7 = vector.load %arg5[%c0_8, %c0_9] : memref<1x32xf32, #tpu.memory_space<vmem>>, vector<1x32xf32>
    %8 = vector.broadcast %7 : vector<1x32xf32> to vector<16x32xf32>
    %9 = arith.addf %6, %8 : vector<16x32xf32>
    %cst_10 = arith.constant 0.000000e+00 : f32
    %10 = vector.broadcast %cst_10 : f32 to vector<16x32xf32>
    %11 = arith.maximumf %9, %10 : vector<16x32xf32>
    %c0_11 = arith.constant 0 : index
    %c0_12 = arith.constant 0 : index
    %12 = vector.load %arg6[%c0_11, %c0_12] : memref<32x32xf32, #tpu.memory_space<vmem>>, vector<32x32xf32>
    %cst_13 = arith.constant dense<0.000000e+00> : vector<16x32xf32>
    %13 = tpu.matmul %11, %12, %cst_13 {dimension_numbers = #tpu.dot_dimension_numbers<[1], [0], [0], [1], [0, 0, 1, 1], [], []>} : vector<16x32xf32>, vector<32x32xf32>, vector<16x32xf32> -> vector<16x32xf32>
    %c0_14 = arith.constant 0 : index
    %c0_15 = arith.constant 0 : index
    %14 = vector.load %arg7[%c0_14, %c0_15] : memref<1x32xf32, #tpu.memory_space<vmem>>, vector<1x32xf32>
    %15 = vector.broadcast %14 : vector<1x32xf32> to vector<16x32xf32>
    %16 = arith.addf %13, %15 : vector<16x32xf32>
    %cst_16 = arith.constant 0.000000e+00 : f32
    %17 = vector.broadcast %cst_16 : f32 to vector<16x32xf32>
    %18 = arith.maximumf %16, %17 : vector<16x32xf32>
    %c0_17 = arith.constant 0 : index
    %c0_18 = arith.constant 0 : index
    %19 = vector.load %arg8[%c0_17, %c0_18] : memref<32x1xf32, #tpu.memory_space<vmem>>, vector<32x1xf32>
    %cst_19 = arith.constant dense<0.000000e+00> : vector<16x1xf32>
    %20 = tpu.matmul %18, %19, %cst_19 {dimension_numbers = #tpu.dot_dimension_numbers<[1], [0], [0], [1], [0, 0, 1, 1], [], []>} : vector<16x32xf32>, vector<32x1xf32>, vector<16x1xf32> -> vector<16x1xf32>
    %c0_20 = arith.constant 0 : index
    %21 = memref.load %arg9[%c0_20] : memref<1xf32, #tpu.memory_space<smem>>
    %22 = vector.broadcast %21 : f32 to vector<16x1xf32>
    %23 = arith.addf %20, %22 : vector<16x1xf32>
    %24 = arith.negf %23 : vector<16x1xf32>
    %25 = math.exp %24 : vector<16x1xf32>
    %cst_21 = arith.constant 1.000000e+00 : f32
    %26 = vector.broadcast %cst_21 : f32 to vector<16x1xf32>
    %27 = arith.addf %26, %25 : vector<16x1xf32>
    %28 = arith.divf %26, %27 : vector<16x1xf32>
    %29 = vector.shape_cast %28 : vector<16x1xf32> to vector<1x1x16xf32>
    %c0_22 = arith.constant 0 : index
    %c0_23 = arith.constant 0 : index
    %c0_24 = arith.constant 0 : index
    %30 = vector.load %arg10[%c0_22, %c0_23, %c0_24] : memref<1x1x16xf32, #tpu.memory_space<vmem>>, vector<1x1x16xf32>
    tpu.vector_store %arg10[%c0_22, %c0_23, %c0_24], %29 {strides = array<i32>} : memref<1x1x16xf32, #tpu.memory_space<vmem>>, vector<1x1x16xf32>,
    return
  }
  func.func @transform_0(%arg0: i32) -> (i32, i32) {
    %c0_i32 = arith.constant 0 : i32
    %c0_i32_0 = arith.constant 0 : i32
    return %arg0, %c0_i32 : i32, i32
  }
  func.func @transform_1(%arg0: i32) -> (i32, i32) {
    %c0_i32 = arith.constant 0 : i32
    %c0_i32_0 = arith.constant 0 : i32
    return %arg0, %c0_i32 : i32, i32
  }
  func.func @transform_2(%arg0: i32) -> (i32, i32) {
    %c0_i32 = arith.constant 0 : i32
    %c0_i32_0 = arith.constant 0 : i32
    %c0_i32_1 = arith.constant 0 : i32
    return %c0_i32, %c0_i32_0 : i32, i32
  }
  func.func @transform_3(%arg0: i32) -> (i32, i32) {
    %c0_i32 = arith.constant 0 : i32
    %c0_i32_0 = arith.constant 0 : i32
    %c0_i32_1 = arith.constant 0 : i32
    return %c0_i32, %c0_i32_0 : i32, i32
  }
  func.func @transform_4(%arg0: i32) -> (i32, i32) {
    %c0_i32 = arith.constant 0 : i32
    %c0_i32_0 = arith.constant 0 : i32
    %c0_i32_1 = arith.constant 0 : i32
    return %c0_i32, %c0_i32_0 : i32, i32
  }
  func.func @transform_5(%arg0: i32) -> (i32, i32) {
    %c0_i32 = arith.constant 0 : i32
    %c0_i32_0 = arith.constant 0 : i32
    %c0_i32_1 = arith.constant 0 : i32
    return %c0_i32, %c0_i32_0 : i32, i32
  }
  func.func @transform_6(%arg0: i32) -> (i32, i32) {
    %c0_i32 = arith.constant 0 : i32
    %c0_i32_0 = arith.constant 0 : i32
    %c0_i32_1 = arith.constant 0 : i32
    return %c0_i32, %c0_i32_0 : i32, i32
  }
  func.func @transform_7(%arg0: i32) -> (i32, i32) {
    %c0_i32 = arith.constant 0 : i32
    %c0_i32_0 = arith.constant 0 : i32
    %c0_i32_1 = arith.constant 0 : i32
    return %c0_i32, %c0_i32_0 : i32, i32
  }
  func.func @transform_8(%arg0: i32) -> i32 {
    %c0_i32 = arith.constant 0 : i32
    %c0_i32_0 = arith.constant 0 : i32
    return %c0_i32 : i32
  }
  func.func @transform_9(%arg0: i32) -> (i32, i32, i32) {
    %c0_i32 = arith.constant 0 : i32
    %c0_i32_0 = arith.constant 0 : i32
    %c0_i32_1 = arith.constant 0 : i32
    return %arg0, %c0_i32, %c0_i32_0 : i32, i32, i32
  }
}

</mosaic_0001>

<llo_original>
// kernel: effect_discrim_forward.1
$region0: #{effect_discrim_forward.1}
  #allocation0 [shape = 'u32[]', space=smem, size = 0x4, offset = 0x4, fixed_abs, tag = 'smem constant byte address 0x4 - core index']
  #allocation1 [shape = 'u32[144,128]{1,0:T(1,128)}', space=vmem, size = 0x12000, scoped, tag = 'internal scratch']
  #allocation2 [shape = 'f32[1]{0:T(128)S(6)}', space=smem, size = 0x200, scoped, tag = 'scoped memory for effect_discrim_forward.1']
  %s0 = inlined_call_operand.vmem [shape: f32[16,16], index: 0, kind: input, shape index: {}]
  %s1 = inlined_call_operand.vmem [shape: f32[16,16], index: 1, kind: input, shape index: {}]
  %s2 = inlined_call_operand.vmem [shape: f32[16,32], index: 2, kind: input, shape index: {}]
  %s3 = inlined_call_operand.vmem [shape: f32[16,32], index: 3, kind: input, shape index: {}]
  %s4 = inlined_call_operand.vmem [shape: f32[1,32], index: 4, kind: input, shape index: {}]
  %s5 = inlined_call_operand.vmem [shape: f32[32,32], index: 5, kind: input, shape index: {}]
  %s6 = inlined_call_operand.vmem [shape: f32[1,32], index: 6, kind: input, shape index: {}]
  %s7 = inlined_call_operand.vmem [shape: f32[32,1], index: 7, kind: input, shape index: {}]
  %s8 = inlined_call_operand.<no memory space> [shape: f32[1], index: 8, kind: input, shape index: {}]
  %s9 = inlined_call_operand.hbm [shape: f32[1,1,16], index: 9, kind: output, shape index: {}]
  %s10 = sld [smem:[#allocation0]]
  $region46: #{effect_discrim_forward.1} parent=0
    _
  %s12 = ssub.s32 1, %s10
  %s13 = scalar_select 0, %s12, %s10
  %14 = sst [smem:[#allocation2]] %s8
  $region1: #{effect_discrim_forward.1} parent=0
    #allocation3 [shape = 'u8[512]{0}', space=vmem, size = 0x400, scoped, tag = 'output window, operand 0, single buffered']
    #allocation4 [shape = 's32[1]{0}', space=sflag, size = 0x4, scoped, tag = 'scoped memory for effect_discrim_forward.1']
    %15 = vsyncpa [#allocation4], 0
    // Predicated region
    $region2: #{effect_discrim_forward.1} parent=1 // pred_check
      _
    $region3: #{effect_discrim_forward.1} parent=1 // pred_check_branch
      %17 = sbr.rel (0) target = $region5
    $region4: #{effect_discrim_forward.1} parent=1 // pred_region
      _
    $region5: #{effect_discrim_forward.1} parent=1 // pred_fallthru
      _
    // Predicated region
    $region6: #{effect_discrim_forward.1} parent=1 // pred_check
      _
    $region7: #{effect_discrim_forward.1} parent=1 // pred_check_branch
      %19 = sbr.rel (0) target = $region9
    $region8: #{effect_discrim_forward.1} parent=1 // pred_region
      _
    $region9: #{effect_discrim_forward.1} parent=1 // pred_fallthru
      _
    // Predicated region
    $region10: #{effect_discrim_forward.1} parent=1 // pred_check
      _
    $region11: #{effect_discrim_forward.1} parent=1 // pred_check_branch
      %21 = sbr.rel (0) target = $region13
    $region12: #{effect_discrim_forward.1} parent=1 // pred_region
      _
    $region13: #{effect_discrim_forward.1} parent=1 // pred_fallthru
      _
    // Predicated region
    $region14: #{effect_discrim_forward.1} parent=1 // pred_check
      _
    $region15: #{effect_discrim_forward.1} parent=1 // pred_check_branch
      %23 = sbr.rel (0) target = $region17
    $region16: #{effect_discrim_forward.1} parent=1 // pred_region
      _
    $region17: #{effect_discrim_forward.1} parent=1 // pred_fallthru
      _
    // Predicated region
    $region18: #{effect_discrim_forward.1} parent=1 // pred_check
      _
    $region19: #{effect_discrim_forward.1} parent=1 // pred_check_branch
      %25 = sbr.rel (0) target = $region21
    $region20: #{effect_discrim_forward.1} parent=1 // pred_region
      _
    $region21: #{effect_discrim_forward.1} parent=1 // pred_fallthru
      _
    // Predicated region
    $region22: #{effect_discrim_forward.1} parent=1 // pred_check
      _
    $region23: #{effect_discrim_forward.1} parent=1 // pred_check_branch
      %27 = sbr.rel (0) target = $region25
    $region24: #{effect_discrim_forward.1} parent=1 // pred_region
      _
    $region25: #{effect_discrim_forward.1} parent=1 // pred_fallthru
      _
    // Predicated region
    $region26: #{effect_discrim_forward.1} parent=1 // pred_check
      _
    $region27: #{effect_discrim_forward.1} parent=1 // pred_check_branch
      %29 = sbr.rel (0) target = $region29
    $region28: #{effect_discrim_forward.1} parent=1 // pred_region
      _
    $region29: #{effect_discrim_forward.1} parent=1 // pred_fallthru
      _
    // Predicated region
    $region30: #{effect_discrim_forward.1} parent=1 // pred_check
      _
    $region31: #{effect_discrim_forward.1} parent=1 // pred_check_branch
      %31 = sbr.rel (0) target = $region33
    $region32: #{effect_discrim_forward.1} parent=1 // pred_region
      _
    $region33: #{effect_discrim_forward.1} parent=1 // pred_fallthru
      _
    // Predicated region
    $region34: #{effect_discrim_forward.1} parent=1 // pred_check
      _
    $region35: #{effect_discrim_forward.1} parent=1 // pred_check_branch
      %33 = sbr.rel (0) target = $region37
    $region36: #{effect_discrim_forward.1} parent=1 // pred_region
      _
    $region37: #{effect_discrim_forward.1} parent=1 // pred_fallthru
      _
    %v34 = vld [vmem:[%s0] sm:$0xff]
    %v35 = vld [vmem:[%s0 + $0x8] sm:$0xff]
    %v36 = vld [vmem:[%s2] sm:$0xff]
    %v37 = vld [vmem:[%s2 + $0x8] sm:$0xff]
    %v38 = vld [vmem:[%s1] sm:$0xff]
    %v39 = vld [vmem:[%s1 + $0x8] sm:$0xff]
    %v40 = vld [vmem:[%s3] sm:$0xff]
    %v41 = vld [vmem:[%s3 + $0x8] sm:$0xff]
    %vm42 = vcmask 130048
    %v44 = vsel %vm42, %v38, 0
    %v47 = vsel %vm42, %v39, 0
    %49 = vmatprep.subr.mxu0 0.0
    %50 = vmatpush1.msra.mxu0 0.0
    %51 = vmatprep.subr.mxu0 0.0
    %52 = vmatpush1.msra.mxu0 0.0
    %53 = vmatprep.subr.mxu0 0.0
    %54 = vmatpush1.msra.mxu0 0.0
    %55 = vmatprep.subr.mxu0 0.0
    %56 = vmatpush1.msra.mxu0 0.0
    %57 = vmatprep.subr.mxu0 0.0
    %58 = vmatpush1.msra.mxu0 0.0
    %59 = vmatprep.subr.mxu0 0.0
    %60 = vmatpush1.msra.mxu0 0.0
    %61 = vmatprep.subr.mxu0 0.0
    %62 = vmatpush1.msra.mxu0 0.0
    %63 = vmatprep.subr.mxu0 0.0
    %64 = vmatpush1.msra.mxu0 0.0
    %65 = vmatprep.subr.mxu0 0.0
    %66 = vmatpush1.msra.mxu0 0.0
    %67 = vmatprep.subr.mxu0 0.0
    %68 = vmatpush1.msra.mxu0 0.0
    %69 = vmatprep.subr.mxu0 0.0
    %70 = vmatpush1.msra.mxu0 0.0
    %71 = vmatprep.subr.mxu0 0.0
    %72 = vmatpush1.msra.mxu0 0.0
    %73 = vmatprep.subr.mxu0 0.0
    %74 = vmatpush1.msra.mxu0 0.0
    %75 = vmatprep.subr.mxu0 0.0
    %76 = vmatpush1.msra.mxu0 0.0
    %77 = vmatprep.subr.mxu0 0.0
    %78 = vmatpush1.msra.mxu0 %v41
    %79 = vmatprep.subr.mxu0 0.0
    %80 = vmatpush1.msra.mxu0 %v40
    %81 = vmatprep.subr.mxu0 0.0
    %82 = vmatpush2.msra.mxu0 0.0
    %83 = vmatprep.subr.mxu0 0.0
    %84 = vmatpush2.msra.mxu0 0.0
    %85 = vmatprep.subr.mxu0 0.0
    %86 = vmatpush2.msra.mxu0 0.0
    %87 = vmatprep.subr.mxu0 0.0
    %88 = vmatpush2.msra.mxu0 0.0
    %89 = vmatprep.subr.mxu0 0.0
    %90 = vmatpush2.msra.mxu0 0.0
    %91 = vmatprep.subr.mxu0 0.0
    %92 = vmatpush2.msra.mxu0 0.0
    %93 = vmatprep.subr.mxu0 0.0
    %94 = vmatpush2.msra.mxu0 0.0
    %95 = vmatprep.subr.mxu0 0.0
    %96 = vmatpush2.msra.mxu0 0.0
    %97 = vmatprep.subr.mxu0 0.0
    %98 = vmatpush2.msra.mxu0 0.0
    %99 = vmatprep.subr.mxu0 0.0
    %100 = vmatpush2.msra.mxu0 0.0
    %101 = vmatprep.subr.mxu0 0.0
    %102 = vmatpush2.msra.mxu0 0.0
    %103 = vmatprep.subr.mxu0 0.0
    %104 = vmatpush2.msra.mxu0 0.0
    %105 = vmatprep.subr.mxu0 0.0
    %106 = vmatpush2.msra.mxu0 0.0
    %107 = vmatprep.subr.mxu0 0.0
    %108 = vmatpush2.msra.mxu0 0.0
    %109 = vmatprep.subr.mxu0 0.0
    %110 = vmatpush2.msra.mxu0 0.0
    %111 = vmatprep.subr.mxu0 0.0
    %112 = vmatpush2.msra.mxu0 0.0
    %113 = vmatprep.mubr.f32.mxu0 0.0
    %114 = vmatmul.mubr.f32.gmra.mxu0 %v44
    %v115 = vpop.f32.mrf.mxu0
    %v116 = vadd.f32 0.0, %v115
    %v117 = vpop.f32.mrf.mxu0
    %118 = vmatprep.mubr.f32.mxu0 0.0
    %119 = vmatmul.mubr.f32.gmra.mxu0 %v47
    %v120 = vpop.f32.mrf.mxu0
    %v121 = vadd.f32 0.0, %v120
    %v122 = vpop.f32.mrf.mxu0
    %123 = vdwg.mxu0
    %v125 = vsel %vm42, %v34, 0
    %v128 = vsel %vm42, %v35, 0
    %130 = vmatprep.subr.mxu0 0.0
    %131 = vmatpush1.msra.mxu0 0.0
    %132 = vmatprep.subr.mxu0 0.0
    %133 = vmatpush1.msra.mxu0 0.0
    %134 = vmatprep.subr.mxu0 0.0
    %135 = vmatpush1.msra.mxu0 0.0
    %136 = vmatprep.subr.mxu0 0.0
    %137 = vmatpush1.msra.mxu0 0.0
    %138 = vmatprep.subr.mxu0 0.0
    %139 = vmatpush1.msra.mxu0 0.0
    %140 = vmatprep.subr.mxu0 0.0
    %141 = vmatpush1.msra.mxu0 0.0
    %142 = vmatprep.subr.mxu0 0.0
    %143 = vmatpush1.msra.mxu0 0.0
    %144 = vmatprep.subr.mxu0 0.0
    %145 = vmatpush1.msra.mxu0 0.0
    %146 = vmatprep.subr.mxu0 0.0
    %147 = vmatpush1.msra.mxu0 0.0
    %148 = vmatprep.subr.mxu0 0.0
    %149 = vmatpush1.msra.mxu0 0.0
    %150 = vmatprep.subr.mxu0 0.0
    %151 = vmatpush1.msra.mxu0 0.0
    %152 = vmatprep.subr.mxu0 0.0
    %153 = vmatpush1.msra.mxu0 0.0
    %154 = vmatprep.subr.mxu0 0.0
    %155 = vmatpush1.msra.mxu0 0.0
    %156 = vmatprep.subr.mxu0 0.0
    %157 = vmatpush1.msra.mxu0 0.0
    %158 = vmatprep.subr.mxu0 0.0
    %159 = vmatpush1.msra.mxu0 %v37
    %160 = vmatprep.subr.mxu0 0.0
    %161 = vmatpush1.msra.mxu0 %v36
    %162 = vmatprep.subr.mxu0 0.0
    %163 = vmatpush2.msra.mxu0 0.0
    %164 = vmatprep.subr.mxu0 0.0
    %165 = vmatpush2.msra.mxu0 0.0
    %166 = vmatprep.subr.mxu0 0.0
    %167 = vmatpush2.msra.mxu0 0.0
    %168 = vmatprep.subr.mxu0 0.0
    %169 = vmatpush2.msra.mxu0 0.0
    %170 = vmatprep.subr.mxu0 0.0
    %171 = vmatpush2.msra.mxu0 0.0
    %172 = vmatprep.subr.mxu0 0.0
    %173 = vmatpush2.msra.mxu0 0.0
    %174 = vmatprep.subr.mxu0 0.0
    %175 = vmatpush2.msra.mxu0 0.0
    %176 = vmatprep.subr.mxu0 0.0
    %177 = vmatpush2.msra.mxu0 0.0
    %178 = vmatprep.subr.mxu0 0.0
    %179 = vmatpush2.msra.mxu0 0.0
    %180 = vmatprep.subr.mxu0 0.0
    %181 = vmatpush2.msra.mxu0 0.0
    %182 = vmatprep.subr.mxu0 0.0
    %183 = vmatpush2.msra.mxu0 0.0
    %184 = vmatprep.subr.mxu0 0.0
    %185 = vmatpush2.msra.mxu0 0.0
    %186 = vmatprep.subr.mxu0 0.0
    %187 = vmatpush2.msra.mxu0 0.0
    %188 = vmatprep.subr.mxu0 0.0
    %189 = vmatpush2.msra.mxu0 0.0
    %190 = vmatprep.subr.mxu0 0.0
    %191 = vmatpush2.msra.mxu0 0.0
    %192 = vmatprep.subr.mxu0 0.0
    %193 = vmatpush2.msra.mxu0 0.0
    %194 = vmatprep.mubr.f32.mxu0 0.0
    %195 = vmatmul.mubr.f32.gmra.mxu0 %v125
    %v196 = vpop.f32.mrf.mxu0
    %v197 = vadd.f32 %v116, %v196
    %v198 = vpop.f32.mrf.mxu0
    %199 = vmatprep.mubr.f32.mxu0 0.0
    %200 = vmatmul.mubr.f32.gmra.mxu0 %v128
    %v201 = vpop.f32.mrf.mxu0
    %v202 = vadd.f32 %v121, %v201
    %v203 = vpop.f32.mrf.mxu0
    %204 = vdwg.mxu0
    %v205 = vld [vmem:[%s4] sm:$0x1]
    %v207 = vlaneseq
    %v208 = vshrl.u32 %v207, 7
    %v209 = vsub.s32 0, %v208
    %v210 = vrot.slane %v205, %v209
    %v212 = vadd.f32 %v197, %v210
    %v213 = vadd.f32 %v202, %v210
    %v214 = vmax.f32 %v212, 0.0
    %v215 = vmax.f32 %v213, 0.0
    %v216 = vld [vmem:[%s5] sm:$0xff]
    %v217 = vld [vmem:[%s5 + $0x8] sm:$0xff]
    %v218 = vld [vmem:[%s5 + $0x10] sm:$0xff]
    %v219 = vld [vmem:[%s5 + $0x18] sm:$0xff]
    %v220 = vld [vmem:[%s6] sm:$0x1]
    %v222 = vlaneseq
    %v223 = vshrl.u32 %v222, 7
    %v224 = vsub.s32 0, %v223
    %v225 = vrot.slane %v220, %v224
    %vm227 = vcmask 261120
    %v229 = vsel %vm227, %v214, 0
    %v232 = vsel %vm227, %v215, 0
    %234 = vmatprep.subr.mxu0 0.0
    %235 = vmatpush1.msra.mxu0 0.0
    %236 = vmatprep.subr.mxu0 0.0
    %237 = vmatpush1.msra.mxu0 0.0
    %238 = vmatprep.subr.mxu0 0.0
    %239 = vmatpush1.msra.mxu0 0.0
    %240 = vmatprep.subr.mxu0 0.0
    %241 = vmatpush1.msra.mxu0 0.0
    %242 = vmatprep.subr.mxu0 0.0
    %243 = vmatpush1.msra.mxu0 0.0
    %244 = vmatprep.subr.mxu0 0.0
    %245 = vmatpush1.msra.mxu0 0.0
    %246 = vmatprep.subr.mxu0 0.0
    %247 = vmatpush1.msra.mxu0 0.0
    %248 = vmatprep.subr.mxu0 0.0
    %249 = vmatpush1.msra.mxu0 0.0
    %250 = vmatprep.subr.mxu0 0.0
    %251 = vmatpush1.msra.mxu0 0.0
    %252 = vmatprep.subr.mxu0 0.0
    %253 = vmatpush1.msra.mxu0 0.0
    %254 = vmatprep.subr.mxu0 0.0
    %255 = vmatpush1.msra.mxu0 0.0
    %256 = vmatprep.subr.mxu0 0.0
    %257 = vmatpush1.msra.mxu0 0.0
    %258 = vmatprep.subr.mxu0 0.0
    %259 = vmatpush1.msra.mxu0 %v219
    %260 = vmatprep.subr.mxu0 0.0
    %261 = vmatpush1.msra.mxu0 %v218
    %262 = vmatprep.subr.mxu0 0.0
    %263 = vmatpush1.msra.mxu0 %v217
    %264 = vmatprep.subr.mxu0 0.0
    %265 = vmatpush1.msra.mxu0 %v216
    %266 = vmatprep.subr.mxu0 0.0
    %267 = vmatpush2.msra.mxu0 0.0
    %268 = vmatprep.subr.mxu0 0.0
    %269 = vmatpush2.msra.mxu0 0.0
    %270 = vmatprep.subr.mxu0 0.0
    %271 = vmatpush2.msra.mxu0 0.0
    %272 = vmatprep.subr.mxu0 0.0
    %273 = vmatpush2.msra.mxu0 0.0
    %274 = vmatprep.subr.mxu0 0.0
    %275 = vmatpush2.msra.mxu0 0.0
    %276 = vmatprep.subr.mxu0 0.0
    %277 = vmatpush2.msra.mxu0 0.0
    %278 = vmatprep.subr.mxu0 0.0
    %279 = vmatpush2.msra.mxu0 0.0
    %280 = vmatprep.subr.mxu0 0.0
    %281 = vmatpush2.msra.mxu0 0.0
    %282 = vmatprep.subr.mxu0 0.0
    %283 = vmatpush2.msra.mxu0 0.0
    %284 = vmatprep.subr.mxu0 0.0
    %285 = vmatpush2.msra.mxu0 0.0
    %286 = vmatprep.subr.mxu0 0.0
    %287 = vmatpush2.msra.mxu0 0.0
    %288 = vmatprep.subr.mxu0 0.0
    %289 = vmatpush2.msra.mxu0 0.0
    %290 = vmatprep.subr.mxu0 0.0
    %291 = vmatpush2.msra.mxu0 0.0
    %292 = vmatprep.subr.mxu0 0.0
    %293 = vmatpush2.msra.mxu0 0.0
    %294 = vmatprep.subr.mxu0 0.0
    %295 = vmatpush2.msra.mxu0 0.0
    %296 = vmatprep.subr.mxu0 0.0
    %297 = vmatpush2.msra.mxu0 0.0
    %298 = vmatprep.mubr.f32.mxu0 0.0
    %299 = vmatmul.mubr.f32.gmra.mxu0 %v229
    %v300 = vpop.f32.mrf.mxu0
    %v301 = vadd.f32 %v225, %v300
    %v302 = vpop.f32.mrf.mxu0
    %303 = vmatprep.mubr.f32.mxu0 0.0
    %304 = vmatmul.mubr.f32.gmra.mxu0 %v232
    %v305 = vpop.f32.mrf.mxu0
    %v306 = vadd.f32 %v225, %v305
    %v307 = vpop.f32.mrf.mxu0
    %308 = vdwg.mxu0
    %v309 = vmax.f32 %v301, 0.0
    %v310 = vmax.f32 %v306, 0.0
    %v311 = vld [vmem:[%s7] sm:$0xff]
    %v312 = vld [vmem:[%s7 + $0x8] sm:$0xff]
    %v313 = vld [vmem:[%s7 + $0x10] sm:$0xff]
    %v314 = vld [vmem:[%s7 + $0x18] sm:$0xff]
    %s315 = sld [smem:[#allocation2]]
    %v316 = vstv %s315
    %v318 = vsel %vm227, %v309, 0
    %v321 = vsel %vm227, %v310, 0
    %323 = vmatprep.subr.mxu0 0.0
    %324 = vmatpush1.msra.mxu0 0.0
    %325 = vmatprep.subr.mxu0 0.0
    %326 = vmatpush1.msra.mxu0 0.0
    %327 = vmatprep.subr.mxu0 0.0
    %328 = vmatpush1.msra.mxu0 0.0
    %329 = vmatprep.subr.mxu0 0.0
    %330 = vmatpush1.msra.mxu0 0.0
    %331 = vmatprep.subr.mxu0 0.0
    %332 = vmatpush1.msra.mxu0 0.0
    %333 = vmatprep.subr.mxu0 0.0
    %334 = vmatpush1.msra.mxu0 0.0
    %335 = vmatprep.subr.mxu0 0.0
    %336 = vmatpush1.msra.mxu0 0.0
    %337 = vmatprep.subr.mxu0 0.0
    %338 = vmatpush1.msra.mxu0 0.0
    %339 = vmatprep.subr.mxu0 0.0
    %340 = vmatpush1.msra.mxu0 0.0
    %341 = vmatprep.subr.mxu0 0.0
    %342 = vmatpush1.msra.mxu0 0.0
    %343 = vmatprep.subr.mxu0 0.0
    %344 = vmatpush1.msra.mxu0 0.0
    %345 = vmatprep.subr.mxu0 0.0
    %346 = vmatpush1.msra.mxu0 0.0
    %347 = vmatprep.subr.mxu0 0.0
    %348 = vmatpush1.msra.mxu0 %v314
    %349 = vmatprep.subr.mxu0 0.0
    %350 = vmatpush1.msra.mxu0 %v313
    %351 = vmatprep.subr.mxu0 0.0
    %352 = vmatpush1.msra.mxu0 %v312
    %353 = vmatprep.subr.mxu0 0.0
    %354 = vmatpush1.msra.mxu0 %v311
    %355 = vmatprep.subr.mxu0 0.0
    %356 = vmatpush2.msra.mxu0 0.0
    %357 = vmatprep.subr.mxu0 0.0
    %358 = vmatpush2.msra.mxu0 0.0
    %359 = vmatprep.subr.mxu0 0.0
    %360 = vmatpush2.msra.mxu0 0.0
    %361 = vmatprep.subr.mxu0 0.0
    %362 = vmatpush2.msra.mxu0 0.0
    %363 = vmatprep.subr.mxu0 0.0
    %364 = vmatpush2.msra.mxu0 0.0
    %365 = vmatprep.subr.mxu0 0.0
    %366 = vmatpush2.msra.mxu0 0.0
    %367 = vmatprep.subr.mxu0 0.0
    %368 = vmatpush2.msra.mxu0 0.0
    %369 = vmatprep.subr.mxu0 0.0
    %370 = vmatpush2.msra.mxu0 0.0
    %371 = vmatprep.subr.mxu0 0.0
    %372 = vmatpush2.msra.mxu0 0.0
    %373 = vmatprep.subr.mxu0 0.0
    %374 = vmatpush2.msra.mxu0 0.0
    %375 = vmatprep.subr.mxu0 0.0
    %376 = vmatpush2.msra.mxu0 0.0
    %377 = vmatprep.subr.mxu0 0.0
    %378 = vmatpush2.msra.mxu0 0.0
    %379 = vmatprep.subr.mxu0 0.0
    %380 = vmatpush2.msra.mxu0 0.0
    %381 = vmatprep.subr.mxu0 0.0
    %382 = vmatpush2.msra.mxu0 0.0
    %383 = vmatprep.subr.mxu0 0.0
    %384 = vmatpush2.msra.mxu0 0.0
    %385 = vmatprep.subr.mxu0 0.0
    %386 = vmatpush2.msra.mxu0 0.0
    %387 = vmatprep.mubr.f32.mxu0 0.0
    %388 = vmatmul.mubr.f32.gmra.mxu0 %v318
    %v389 = vpop.f32.mrf.mxu0
    %v390 = vadd.f32 %v316, %v389
    %v391 = vpop.f32.mrf.mxu0
    %392 = vmatprep.mubr.f32.mxu0 0.0
    %393 = vmatmul.mubr.f32.gmra.mxu0 %v321
    %v394 = vpop.f32.mrf.mxu0
    %v395 = vadd.f32 %v316, %v394
    %v396 = vpop.f32.mrf.mxu0
    %397 = vdwg.mxu0
    %v398 = vxor.u32 %v390, 2147483648
    %v399 = vxor.u32 %v395, 2147483648
    %v400 = vmul.f32 %v398, 1.442695
    %v401 = vpow.pop %v400
    %v402 = vmul.f32 %v399, 1.442695
    %v403 = vpow.pop %v402
    %v404 = vadd.f32 %v401, 1.0
    %v405 = vadd.f32 %v403, 1.0
    %v406 = vrcp.pop %v404
    %v407 = vmul.f32 1.0, %v406
    %v408 = vrcp.pop %v405
    %v409 = vmul.f32 1.0, %v408
    %412 = vset.pattern.permute.xlu0 0
    %413 = vperm.xlu0 %412, %v407
    %v414 = vpop.permute.xlu0 %413
    %415 = vset.pattern.permute.xlu0 0
    %416 = vperm.xlu0 %415, %v409
    %v417 = vpop.permute.xlu0 %416
    %v418 = vlaneseq
    %v419 = vand.u32 %v418, 127
    %v420 = vlaneseq
    %v421 = vshrl.u32 %v420, 7
    %v422 = vsub.s32 %v419, %v421
    %v423 = vrot.slane %v414, %v422
    %v424 = vadd.s32 %v419, 4294967288
    %v425 = vlaneseq
    %v426 = vshrl.u32 %v425, 7
    %v427 = vsub.s32 %v424, %v426
    %v428 = vrot.slane %v417, %v427
    %vm429 = vcmask 130112
    %v430 = vsel %vm429, %v428, %v423
    %vm432 = vcmask 122880
    %433 = vst.msk [vmem:[#allocation3] sm:$0x1] %vm432, %v430
    // Predicated region
    $region38: #{effect_discrim_forward.1} parent=1 // pred_check
      _
    $region39: #{effect_discrim_forward.1} parent=1 // pred_check_branch
      %435 = sbr.rel (0) target = $region41
    $region40: #{effect_discrim_forward.1} parent=1 // pred_region
      %s437 = ssub.s32 16, 16
      %438 = vsyncadd [#allocation4], %s437
      %s440 = sshll.u32 [#allocation3], 4
      %s441 = int_to_ptr.vmem [resolvable:$true] %s440
      %443 = dma.vmem_to_hbm [thread:$0]  %s441, 16, %s9, [#allocation4]
    $region41: #{effect_discrim_forward.1} parent=1 // pred_fallthru
      _
    // Predicated region
    $region42: #{effect_discrim_forward.1} parent=1 // pred_check
      _
    $region43: #{effect_discrim_forward.1} parent=1 // pred_check_branch
      %445 = sbr.rel (0) target = $region45
    $region44: #{effect_discrim_forward.1} parent=1 // pred_region
      %446 = dma.done [#allocation4], 16
    $region45: #{effect_discrim_forward.1} parent=1 // pred_fallthru
      _
    %447 = vsyncpa [#allocation4], 1

</llo_original>
